<compile_context>
chip_gen: v6e
topology: v6e:2x2x1
jax: 0.10.0
libtpu: 0.0.40
codegen_flags: <defaults>
</compile_context>

<pallas_src>
import jax
import jax.numpy as jnp
from jax import lax
from jax.experimental import pallas as pl
from jax.experimental.pallas import tpu as pltpu

NEG_SLOPE = 0.01  # torch.nn.LeakyReLU default negative_slope


def _leaky_relu(x):
    return jnp.where(x >= 0, x, NEG_SLOPE * x)


# ------------------------------- Pallas kernel -------------------------------

def _make_block_kernel(kernel_size, dilation, cout, has_res, final, Lp):
    K = kernel_size
    pad = (K - 1) * dilation

    def stack_taps(padded):
        # padded: (C, pad + Lp); tap j of output column t reads column
        # t + j*dilation of the left-padded copy, i.e. x[t - (K-1-j)*dilation].
        if K == 1:
            return padded[:, pad:pad + Lp]
        return jnp.concatenate(
            [padded[:, j * dilation: j * dilation + Lp] for j in range(K)],
            axis=0)                                        # (K*C, Lp)

    def kernel(x_ref, w1_ref, b1_ref, w2_ref, b2_ref, o_ref):
        xp_f32 = x_ref[0]                                  # (Cin, pad+Lp) f32
        xp = xp_f32.astype(jnp.bfloat16)

        # ---- conv1 (+ fused 1x1 residual projection when has_res) ----------
        xs1 = stack_taps(xp)                               # (K*Cin, Lp) bf16
        acc1 = jnp.dot(w1_ref[...], xs1,
                       preferred_element_type=jnp.float32) + b1_ref[...]
        if has_res:
            h = _leaky_relu(acc1[:cout])                   # conv1 rows
            res = acc1[cout:]                              # 1x1-conv residual rows
        else:
            h = _leaky_relu(acc1)
            res = xp_f32[:, pad:pad + Lp]                  # identity residual (f32)

        # ---- conv2 ----------------------------------------------------------
        h_lo = h.astype(jnp.bfloat16)
        if pad > 0:
            hpad = jnp.concatenate(
                [jnp.zeros((cout, pad), jnp.bfloat16), h_lo], axis=1)
        else:
            hpad = h_lo
        xs2 = stack_taps(hpad)                             # (K*Cout, Lp) bf16
        acc2 = jnp.dot(w2_ref[...], xs2,
                       preferred_element_type=jnp.float32) + b2_ref[...]

        out = _leaky_relu(acc2) + res
        if final:
            out = _leaky_relu(out)
        o_ref[0] = out.astype(o_ref.dtype)

    return kernel


# --------------------------------- wrapper -----------------------------------

def _mxu_weight(w_oik):
    """torch Conv1d weight (Cout, Cin, K) -> (Cout, K*Cin): column block j
    holds w[:, :, j] so it lines up with the stacked-tap operand."""
    co, ci, k = w_oik.shape
    return jnp.transpose(w_oik, (0, 2, 1)).reshape(co, k * ci)


def causal_conv_block(x, params, kernel_size, dilation, final=False):
    """CausalConvolutionBlock.forward. x: (B, Cin, L) f32 -> (B, Cout, L) f32."""
    B, cin, L = x.shape
    K = kernel_size
    cout = params["w1"].shape[0]
    has_res = "wres" in params
    pad = (K - 1) * dilation

    # Lane-dense time axis (multiple of 128) + the causal left zero-pad baked
    # into the HBM slab once, so the kernel only slices (never pads) conv1.
    Lp = max(128, ((L + 127) // 128) * 128)
    x_in = jnp.pad(x, ((0, 0), (0, 0), (pad, Lp - L)))

    w1 = _mxu_weight(params["w1"])                         # (Cout, K*Cin) f32
    b1 = params["b1"].reshape(cout, 1).astype(jnp.float32)
    w2 = _mxu_weight(params["w2"]).astype(jnp.bfloat16)    # (Cout, K*Cout)
    b2 = params["b2"].reshape(cout, 1).astype(jnp.float32)

    if has_res:
        # Fuse the 1x1 residual conv into conv1's matmul: its rows only see
        # the unshifted (last) tap block of the stacked operand.
        wres_rows = jnp.zeros((cout, K * cin), jnp.float32)
        wres_rows = wres_rows.at[:, (K - 1) * cin:].set(params["wres"])
        w1 = jnp.concatenate([w1, wres_rows], axis=0)      # (2*Cout, K*Cin)
        b1 = jnp.concatenate(
            [b1, params["bres"].reshape(cout, 1).astype(jnp.float32)], axis=0)
    w1 = w1.astype(jnp.bfloat16)
    c1 = w1.shape[0]                                       # Cout or 2*Cout

    out = pl.pallas_call(
        _make_block_kernel(K, dilation, cout, has_res, final, Lp),
        out_shape=jax.ShapeDtypeStruct((B, cout, Lp), jnp.float32),
        grid=(B,),
        in_specs=[
            pl.BlockSpec((1, cin, pad + Lp), lambda b: (b, 0, 0)),   # x (one sample)
            pl.BlockSpec((c1, K * cin), lambda b: (0, 0)),           # w1 (+wres rows)
            pl.BlockSpec((c1, 1), lambda b: (0, 0)),                 # b1 (+bres)
            pl.BlockSpec((cout, K * cout), lambda b: (0, 0)),        # w2
            pl.BlockSpec((cout, 1), lambda b: (0, 0)),               # b2
        ],
        out_specs=pl.BlockSpec((1, cout, Lp), lambda b: (b, 0, 0)),
        compiler_params=pltpu.CompilerParams(dimension_semantics=("parallel",)),
    )(x_in, w1, b1, w2, b2)
    return out[:, :, :L] if Lp != L else out


# ----------------------- deterministic parameter init ------------------------

def init_block_params(key, in_channels, out_channels, kernel_size):
    k1, k2, k3, k4, k5, k6 = jax.random.split(key, 6)
    s1 = 1.0 / float(in_channels * kernel_size) ** 0.5
    s2 = 1.0 / float(out_channels * kernel_size) ** 0.5
    p = {
        # torch Conv1d layout: (Cout, Cin, K)
        "w1": s1 * jax.random.normal(k1, (out_channels, in_channels, kernel_size), jnp.float32),
        "b1": s1 * jax.random.normal(k2, (out_channels,), jnp.float32),
        "w2": s2 * jax.random.normal(k3, (out_channels, out_channels, kernel_size), jnp.float32),
        "b2": s2 * jax.random.normal(k4, (out_channels,), jnp.float32),
    }
    if in_channels != out_channels:
        sr = 1.0 / float(in_channels) ** 0.5
        p["wres"] = sr * jax.random.normal(k5, (out_channels, in_channels), jnp.float32)
        p["bres"] = sr * jax.random.normal(k6, (out_channels,), jnp.float32)
    return p


# ----------------------------- pure-JAX reference ----------------------------

def _conv1d_causal_ref(x, w_oik, b, dilation):
    # Conv1d(padding=(K-1)*d) followed by Chomp1d == left-pad-only conv.
    K = w_oik.shape[-1]
    pad = (K - 1) * dilation
    out = lax.conv_general_dilated(
        x, w_oik, window_strides=(1,), padding=[(pad, 0)],
        rhs_dilation=(dilation,), dimension_numbers=("NCH", "OIH", "NCH"))
    return out + b[None, :, None]


def causal_conv_block_ref(x, p, kernel_size, dilation, final=False):
    h = _leaky_relu(_conv1d_causal_ref(x, p["w1"], p["b1"], dilation))
    h = _leaky_relu(_conv1d_causal_ref(h, p["w2"], p["b2"], dilation))
    if "wres" in p:
        res = jnp.einsum("oc,bcl->bol", p["wres"], x) + p["bres"][None, :, None]
    else:
        res = x
    out = h + res
    return _leaky_relu(out) if final else out


# ------------------------------------ main ------------------------------------

if __name__ == "__main__":
    B, in_channels, channels, L = 2, 4, 32, 120
    kernel_size = 3

    key = jax.random.PRNGKey(0)
    kx, k1, k2 = jax.random.split(key, 3)
    x = jax.random.normal(kx, (B, in_channels, L), jnp.float32)

    # Block A: channel-changing (1x1-conv residual), dilation 2, final=False.
    pA = init_block_params(k1, in_channels, channels, kernel_size)
    # Block B: same-channel (identity residual), dilation 4, final=True.
    pB = init_block_params(k2, channels, channels, kernel_size)

    yA = causal_conv_block(x, pA, kernel_size, dilation=2, final=False)
    yB = causal_conv_block(yA, pB, kernel_size, dilation=4, final=True)
    yB = jax.block_until_ready(yB)
    assert yA.shape == (B, channels, L), yA.shape
    assert yB.shape == (B, channels, L), yB.shape

    # Per-block validation against the f32 lax.conv reference (bf16 MXU inputs
    # in the kernel -> tolerance sized for bf16 rounding).
    rA = causal_conv_block_ref(x, pA, kernel_size, 2, final=False)
    errA = float(jnp.max(jnp.abs(yA - rA)))
    if not bool(jnp.allclose(yA, rA, atol=4e-2, rtol=4e-2)):
        raise AssertionError(f"block A kernel/ref mismatch, max abs err = {errA}")

    rB = causal_conv_block_ref(yA, pB, kernel_size, 4, final=True)
    errB = float(jnp.max(jnp.abs(yB - rB)))
    if not bool(jnp.allclose(yB, rB, atol=4e-2, rtol=4e-2)):
        raise AssertionError(f"block B kernel/ref mismatch, max abs err = {errB}")

    print("KERNEL_OK")
</pallas_src>

<mosaic_0001>
module attributes {stable_mosaic.version = 11 : i64} {
  func.func @kernel(%arg0: i32, %arg1: memref<1x4x132xf32, #tpu.memory_space<vmem>>, %arg2: memref<64x12xbf16, #tpu.memory_space<vmem>>, %arg3: memref<64x1xf32, #tpu.memory_space<vmem>>, %arg4: memref<32x96xbf16, #tpu.memory_space<vmem>>, %arg5: memref<32x1xf32, #tpu.memory_space<vmem>>, %arg6: memref<1x32x128xf32, #tpu.memory_space<vmem>>) attributes {dimension_semantics = [#tpu.dimension_semantics<parallel>], iteration_bounds = array<i64: 2>, scalar_prefetch = 0 : i64, scratch_operands = 0 : i64, tpu.core_type = #tpu.core_type<tc>, window_params = [{transform_indices = @transform_0, window_bounds = array<i64: 1, 4, 132>}, {pipeline_mode = #tpu.pipeline_mode<synchronous>, transform_indices = @transform_1, window_bounds = array<i64: 64, 12>}, {pipeline_mode = #tpu.pipeline_mode<synchronous>, transform_indices = @transform_2, window_bounds = array<i64: 64, 1>}, {pipeline_mode = #tpu.pipeline_mode<synchronous>, transform_indices = @transform_3, window_bounds = array<i64: 32, 96>}, {pipeline_mode = #tpu.pipeline_mode<synchronous>, transform_indices = @transform_4, window_bounds = array<i64: 32, 1>}, {transform_indices = @transform_5, window_bounds = array<i64: 1, 32, 128>}]} {
    %c0 = arith.constant 0 : index
    %c0_0 = arith.constant 0 : index
    %c0_1 = arith.constant 0 : index
    %0 = vector.load %arg1[%c0, %c0_0, %c0_1] : memref<1x4x132xf32, #tpu.memory_space<vmem>>, vector<1x4x132xf32>
    %1 = vector.shape_cast %0 : vector<1x4x132xf32> to vector<4x132xf32>
    %2 = arith.truncf %1 : vector<4x132xf32> to vector<4x132xbf16>
    %3 = vector.extract_strided_slice %2 {offsets = [0, 0], sizes = [4, 128], strides = [1, 1]} : vector<4x132xbf16> to vector<4x128xbf16>
    %4 = vector.extract_strided_slice %2 {offsets = [0, 2], sizes = [4, 128], strides = [1, 1]} : vector<4x132xbf16> to vector<4x128xbf16>
    %5 = vector.extract_strided_slice %2 {offsets = [0, 4], sizes = [4, 128], strides = [1, 1]} : vector<4x132xbf16> to vector<4x128xbf16>
    %6 = tpu.concatenate %3, %4, %5 in 0 : vector<4x128xbf16>, vector<4x128xbf16>, vector<4x128xbf16> -> vector<12x128xbf16>
    %c0_2 = arith.constant 0 : index
    %c0_3 = arith.constant 0 : index
    %7 = vector.load %arg2[%c0_2, %c0_3] : memref<64x12xbf16, #tpu.memory_space<vmem>>, vector<64x12xbf16>
    %cst = arith.constant dense<0.000000e+00> : vector<64x128xf32>
    %8 = tpu.matmul %7, %6, %cst {dimension_numbers = #tpu.dot_dimension_numbers<[1], [0], [0], [1], [0, 0, 1, 1], [], []>} : vector<64x12xbf16>, vector<12x128xbf16>, vector<64x128xf32> -> vector<64x128xf32>
    %c0_4 = arith.constant 0 : index
    %c0_5 = arith.constant 0 : index
    %9 = vector.load %arg3[%c0_4, %c0_5] : memref<64x1xf32, #tpu.memory_space<vmem>>, vector<64x1xf32>
    %10 = vector.broadcast %9 : vector<64x1xf32> to vector<64x128xf32>
    %11 = arith.addf %8, %10 : vector<64x128xf32>
    %12 = vector.extract_strided_slice %11 {offsets = [0, 0], sizes = [32, 128], strides = [1, 1]} : vector<64x128xf32> to vector<32x128xf32>
    %cst_6 = arith.constant 0.000000e+00 : f32
    %13 = vector.broadcast %cst_6 : f32 to vector<32x128xf32>
    %14 = arith.cmpf oge, %12, %13 : vector<32x128xf32>
    %cst_7 = arith.constant 0.00999999977 : f32
    %15 = vector.broadcast %cst_7 : f32 to vector<32x128xf32>
    %16 = arith.mulf %15, %12 : vector<32x128xf32>
    %17 = arith.select %14, %12, %16 : vector<32x128xi1>, vector<32x128xf32>
    %18 = vector.extract_strided_slice %11 {offsets = [32, 0], sizes = [32, 128], strides = [1, 1]} : vector<64x128xf32> to vector<32x128xf32>
    %19 = arith.truncf %17 : vector<32x128xf32> to vector<32x128xbf16>
    %cst_8 = arith.constant 0.000000e+00 : bf16
    %20 = vector.broadcast %cst_8 : bf16 to vector<32x4xbf16>
    %21 = tpu.concatenate %20, %19 in 1 : vector<32x4xbf16>, vector<32x128xbf16> -> vector<32x132xbf16>
    %22 = vector.extract_strided_slice %21 {offsets = [0, 0], sizes = [32, 128], strides = [1, 1]} : vector<32x132xbf16> to vector<32x128xbf16>
    %23 = vector.extract_strided_slice %21 {offsets = [0, 2], sizes = [32, 128], strides = [1, 1]} : vector<32x132xbf16> to vector<32x128xbf16>
    %24 = vector.extract_strided_slice %21 {offsets = [0, 4], sizes = [32, 128], strides = [1, 1]} : vector<32x132xbf16> to vector<32x128xbf16>
    %25 = tpu.concatenate %22, %23, %24 in 0 : vector<32x128xbf16>, vector<32x128xbf16>, vector<32x128xbf16> -> vector<96x128xbf16>
    %c0_9 = arith.constant 0 : index
    %c0_10 = arith.constant 0 : index
    %26 = vector.load %arg4[%c0_9, %c0_10] : memref<32x96xbf16, #tpu.memory_space<vmem>>, vector<32x96xbf16>
    %cst_11 = arith.constant dense<0.000000e+00> : vector<32x128xf32>
    %27 = tpu.matmul %26, %25, %cst_11 {dimension_numbers = #tpu.dot_dimension_numbers<[1], [0], [0], [1], [0, 0, 1, 1], [], []>} : vector<32x96xbf16>, vector<96x128xbf16>, vector<32x128xf32> -> vector<32x128xf32>
    %c0_12 = arith.constant 0 : index
    %c0_13 = arith.constant 0 : index
    %28 = vector.load %arg5[%c0_12, %c0_13] : memref<32x1xf32, #tpu.memory_space<vmem>>, vector<32x1xf32>
    %29 = vector.broadcast %28 : vector<32x1xf32> to vector<32x128xf32>
    %30 = arith.addf %27, %29 : vector<32x128xf32>
    %cst_14 = arith.constant 0.000000e+00 : f32
    %31 = vector.broadcast %cst_14 : f32 to vector<32x128xf32>
    %32 = arith.cmpf oge, %30, %31 : vector<32x128xf32>
    %cst_15 = arith.constant 0.00999999977 : f32
    %33 = vector.broadcast %cst_15 : f32 to vector<32x128xf32>
    %34 = arith.mulf %33, %30 : vector<32x128xf32>
    %35 = arith.select %32, %30, %34 : vector<32x128xi1>, vector<32x128xf32>
    %36 = arith.addf %35, %18 : vector<32x128xf32>
    %c0_16 = arith.constant 0 : index
    %c0_17 = arith.constant 0 : index
    %c0_18 = arith.constant 0 : index
    %37 = vector.load %arg6[%c0_16, %c0_17, %c0_18] : memref<1x32x128xf32, #tpu.memory_space<vmem>>, vector<1x32x128xf32>
    %38 = vector.shape_cast %37 : vector<1x32x128xf32> to vector<32x128xf32>
    %39 = vector.shape_cast %36 : vector<32x128xf32> to vector<1x32x128xf32>
    tpu.vector_store %arg6[%c0_16, %c0_17, %c0_18], %39 {strides = array<i32>} : memref<1x32x128xf32, #tpu.memory_space<vmem>>, vector<1x32x128xf32>,
    return
  }
  func.func @transform_0(%arg0: i32) -> (i32, i32, i32) {
    %c0_i32 = arith.constant 0 : i32
    %c0_i32_0 = arith.constant 0 : i32
    %c0_i32_1 = arith.constant 0 : i32
    return %arg0, %c0_i32, %c0_i32_0 : i32, i32, i32
  }
  func.func @transform_1(%arg0: i32) -> (i32, i32) {
    %c0_i32 = arith.constant 0 : i32
    %c0_i32_0 = arith.constant 0 : i32
    %c0_i32_1 = arith.constant 0 : i32
    return %c0_i32, %c0_i32_0 : i32, i32
  }
  func.func @transform_2(%arg0: i32) -> (i32, i32) {
    %c0_i32 = arith.constant 0 : i32
    %c0_i32_0 = arith.constant 0 : i32
    %c0_i32_1 = arith.constant 0 : i32
    return %c0_i32, %c0_i32_0 : i32, i32
  }
  func.func @transform_3(%arg0: i32) -> (i32, i32) {
    %c0_i32 = arith.constant 0 : i32
    %c0_i32_0 = arith.constant 0 : i32
    %c0_i32_1 = arith.constant 0 : i32
    return %c0_i32, %c0_i32_0 : i32, i32
  }
  func.func @transform_4(%arg0: i32) -> (i32, i32) {
    %c0_i32 = arith.constant 0 : i32
    %c0_i32_0 = arith.constant 0 : i32
    %c0_i32_1 = arith.constant 0 : i32
    return %c0_i32, %c0_i32_0 : i32, i32
  }
  func.func @transform_5(%arg0: i32) -> (i32, i32, i32) {
    %c0_i32 = arith.constant 0 : i32
    %c0_i32_0 = arith.constant 0 : i32
    %c0_i32_1 = arith.constant 0 : i32
    return %arg0, %c0_i32, %c0_i32_0 : i32, i32, i32
  }
}

</mosaic_0001>

<llo_original>
// kernel: tpu_custom_call.1
$region0: #{tpu_custom_call.1}
  #allocation0 [shape = 'u32[]', space=smem, size = 0x4, offset = 0x4, fixed_abs, tag = 'smem constant byte address 0x4 - core index']
  #allocation1 [shape = 'u32[144,128]{1,0:T(1,128)}', space=vmem, size = 0x12000, scoped, tag = 'internal scratch']
  %s0 = inlined_call_operand.vmem [shape: f32[2,4,132], index: 0, kind: input, shape index: {}]
  %s1 = inlined_call_operand.vmem [shape: bf16[64,12], index: 1, kind: input, shape index: {}]
  %s2 = inlined_call_operand.vmem [shape: f32[64,1], index: 2, kind: input, shape index: {}]
  %s3 = inlined_call_operand.vmem [shape: bf16[32,96], index: 3, kind: input, shape index: {}]
  %s4 = inlined_call_operand.vmem [shape: f32[32,1], index: 4, kind: input, shape index: {}]
  %s5 = inlined_call_operand.hbm [shape: f32[2,32,128], index: 5, kind: output, shape index: {}]
  %s6 = sld [smem:[#allocation0]]
  $region53: #{tpu_custom_call.1} parent=0
    _
  %s8 = ssub.s32 1, %s6
  %s9 = scalar_select 0, %s8, %s6
  $region1: #{tpu_custom_call.1} parent=0
    #allocation2 [shape = 'u8[32768]{0}', space=vmem, size = 0x8000, scoped, tag = 'output window, operand 0']
    #allocation3 [shape = 's32[2]{0}', space=sflag, size = 0x8, scoped, tag = 'scoped memory for tpu_custom_call.1']
    %10 = vsyncpa [#allocation3], 0
    %s11 = scalar_lea.sflag [#allocation3], 1
    %12 = vsyncpa %s11, 0
    loop: start=0, step=1, limit=4
    $region2: #{tpu_custom_call.1} parent=1 // loop_pre_header
      _
    $region3: #{tpu_custom_call.1} parent=1 // loop_header
      %s14 = sphi 0, %s18
      %p15 = scmp.ge.s32.totalorder %s14, 4
      %s24 = sphi 0, %s26
      %s27 = sphi 0, %s24
      %s28 = sphi 0, %s27
      %s44 = sphi 0, %s28
      %s48 = sphi 0, %s48
      %s50 = sphi 0, %s48
      %s51 = sphi 0, %s50
      %s65 = sphi 0, %s51
      %s69 = sphi 0, %s69
      %s71 = sphi 0, %s69
      %s72 = sphi 0, %s71
      %s86 = sphi 0, %s72
      %s90 = sphi 0, %s90
      %s92 = sphi 0, %s90
      %s93 = sphi 0, %s92
      %s107 = sphi 0, %s93
      %s111 = sphi 0, %s111
      %s113 = sphi 0, %s111
      %s114 = sphi 0, %s113
      %s128 = sphi 0, %s114
      %s134 = sphi 0, %s136
      %s137 = sphi 0, %s134
      %s138 = sphi 0, %s137
      %s154 = sphi 0, %s138
    $region4: #{tpu_custom_call.1} parent=1 // loop_header_branch
      %17 = sbr.rel (%p15) target = $region8
    $region5: #{tpu_custom_call.1} parent=1 // loop_body
      %s19 = ssub.s32 %s14, 1
      %s20 = ssub.s32 %s14, 2
      %s21 = sadd.s32 %s14, 1
      %s22 = ssub.s32 %s14, %s21
      %p23 = scmp.eq.s32.totalorder %s22, 0
      %s25 = sadd.s32 %s24, 1
      %s26 = scalar_select %p23, %s24, %s25
      %p29 = pneg %p23
      %p30 = scmp.eq.s32.totalorder %s14, 1
      %p31 = por %p29, %p30
      %p32 = scmp.ne.s32.totalorder %s24, %s27
      %p33 = scmp.eq.s32.totalorder %s14, 0
      %p34 = por %p32, %p33
      %p35 = scmp.ne.s32.totalorder %s24, %s27
      %p36 = scmp.eq.s32.totalorder %s19, 1
      %p37 = por %p35, %p36
      %p38 = scmp.ne.s32.totalorder %s27, %s28
      %p39 = scmp.eq.s32.totalorder %s19, 0
      %p40 = por %p38, %p39
      %p41 = scmp.ne.s32.totalorder %s27, %s28
      %p42 = scmp.eq.s32.totalorder %s20, 1
      %p43 = por %p41, %p42
      %p45 = scmp.ne.s32.totalorder %s28, %s44
      %p46 = scmp.eq.s32.totalorder %s20, 0
      %p47 = por %p45, %p46
      %s49 = sadd.s32 %s48, 1
      %p52 = scmp.eq.s32.totalorder %s14, 1
      %p53 = scmp.ne.s32.totalorder %s48, %s50
      %p54 = scmp.eq.s32.totalorder %s14, 0
      %p55 = por %p53, %p54
      %p56 = scmp.ne.s32.totalorder %s48, %s50
      %p57 = scmp.eq.s32.totalorder %s19, 1
      %p58 = por %p56, %p57
      %p59 = scmp.ne.s32.totalorder %s50, %s51
      %p60 = scmp.eq.s32.totalorder %s19, 0
      %p61 = por %p59, %p60
      %p62 = scmp.ne.s32.totalorder %s50, %s51
      %p63 = scmp.eq.s32.totalorder %s20, 1
      %p64 = por %p62, %p63
      %p66 = scmp.ne.s32.totalorder %s51, %s65
      %p67 = scmp.eq.s32.totalorder %s20, 0
      %p68 = por %p66, %p67
      %s70 = sadd.s32 %s69, 1
      %p73 = scmp.eq.s32.totalorder %s14, 1
      %p74 = scmp.ne.s32.totalorder %s69, %s71
      %p75 = scmp.eq.s32.totalorder %s14, 0
      %p76 = por %p74, %p75
      %p77 = scmp.ne.s32.totalorder %s69, %s71
      %p78 = scmp.eq.s32.totalorder %s19, 1
      %p79 = por %p77, %p78
      %p80 = scmp.ne.s32.totalorder %s71, %s72
      %p81 = scmp.eq.s32.totalorder %s19, 0
      %p82 = por %p80, %p81
      %p83 = scmp.ne.s32.totalorder %s71, %s72
      %p84 = scmp.eq.s32.totalorder %s20, 1
      %p85 = por %p83, %p84
      %p87 = scmp.ne.s32.totalorder %s72, %s86
      %p88 = scmp.eq.s32.totalorder %s20, 0
      %p89 = por %p87, %p88
      %s91 = sadd.s32 %s90, 1
      %p94 = scmp.eq.s32.totalorder %s14, 1
      %p95 = scmp.ne.s32.totalorder %s90, %s92
      %p96 = scmp.eq.s32.totalorder %s14, 0
      %p97 = por %p95, %p96
      %p98 = scmp.ne.s32.totalorder %s90, %s92
      %p99 = scmp.eq.s32.totalorder %s19, 1
      %p100 = por %p98, %p99
      %p101 = scmp.ne.s32.totalorder %s92, %s93
      %p102 = scmp.eq.s32.totalorder %s19, 0
      %p103 = por %p101, %p102
      %p104 = scmp.ne.s32.totalorder %s92, %s93
      %p105 = scmp.eq.s32.totalorder %s20, 1
      %p106 = por %p104, %p105
      %p108 = scmp.ne.s32.totalorder %s93, %s107
      %p109 = scmp.eq.s32.totalorder %s20, 0
      %p110 = por %p108, %p109
      %s112 = sadd.s32 %s111, 1
      %p115 = scmp.eq.s32.totalorder %s14, 1
      %p116 = scmp.ne.s32.totalorder %s111, %s113
      %p117 = scmp.eq.s32.totalorder %s14, 0
      %p118 = por %p116, %p117
      %p119 = scmp.ne.s32.totalorder %s111, %s113
      %p120 = scmp.eq.s32.totalorder %s19, 1
      %p121 = por %p119, %p120
      %p122 = scmp.ne.s32.totalorder %s113, %s114
      %p123 = scmp.eq.s32.totalorder %s19, 0
      %p124 = por %p122, %p123
      %p125 = scmp.ne.s32.totalorder %s113, %s114
      %p126 = scmp.eq.s32.totalorder %s20, 1
      %p127 = por %p125, %p126
      %p129 = scmp.ne.s32.totalorder %s114, %s128
      %p130 = scmp.eq.s32.totalorder %s20, 0
      %p131 = por %p129, %p130
      %s132 = ssub.s32 %s14, %s21
      %p133 = scmp.eq.s32.totalorder %s132, 0
      %s135 = sadd.s32 %s134, 1
      %s136 = scalar_select %p133, %s134, %s135
      %p139 = pneg %p133
      %p140 = scmp.eq.s32.totalorder %s14, 1
      %p141 = por %p139, %p140
      %p142 = scmp.ne.s32.totalorder %s134, %s137
      %p143 = scmp.eq.s32.totalorder %s14, 0
      %p144 = por %p142, %p143
      %p145 = scmp.ne.s32.totalorder %s134, %s137
      %p146 = scmp.eq.s32.totalorder %s19, 1
      %p147 = por %p145, %p146
      %p148 = scmp.ne.s32.totalorder %s137, %s138
      %p149 = scmp.eq.s32.totalorder %s19, 0
      %p150 = por %p148, %p149
      %p151 = scmp.ne.s32.totalorder %s137, %s138
      %p152 = scmp.eq.s32.totalorder %s20, 1
      %p153 = por %p151, %p152
      %p155 = scmp.ne.s32.totalorder %s138, %s154
      %p156 = scmp.eq.s32.totalorder %s20, 0
      %p157 = por %p155, %p156
      %p158 = scmp.le.s32.totalorder 1, %s14
      %p159 = scmp.lt.s32.totalorder %s14, 3
      %p160 = pnand %p158, %p159
      %p161 = pneg %p160
      // Predicated region
      $region9: #{tpu_custom_call.1} parent=5 // pred_check
        _
      $region10: #{tpu_custom_call.1} parent=5 // pred_check_branch
        %163 = sbr.rel (%p160) target = $region12
      $region11: #{tpu_custom_call.1} parent=5 // pred_region
        %s164 = ssub.s32 %s14, 1
        // Predicated region
        $region13: #{tpu_custom_call.1} parent=11 // pred_check
          %p165 = pneg %p61
        $region14: #{tpu_custom_call.1} parent=11 // pred_check_branch
          %167 = sbr.rel (%p165) target = $region16
        $region15: #{tpu_custom_call.1} parent=11 // pred_region
          _
        $region16: #{tpu_custom_call.1} parent=11 // pred_fallthru
          _
        // Predicated region
        $region17: #{tpu_custom_call.1} parent=11 // pred_check
          %p168 = pneg %p82
        $region18: #{tpu_custom_call.1} parent=11 // pred_check_branch
          %170 = sbr.rel (%p168) target = $region20
        $region19: #{tpu_custom_call.1} parent=11 // pred_region
          _
        $region20: #{tpu_custom_call.1} parent=11 // pred_fallthru
          _
        // Predicated region
        $region21: #{tpu_custom_call.1} parent=11 // pred_check
          %p171 = pneg %p103
        $region22: #{tpu_custom_call.1} parent=11 // pred_check_branch
          %173 = sbr.rel (%p171) target = $region24
        $region23: #{tpu_custom_call.1} parent=11 // pred_region
          _
        $region24: #{tpu_custom_call.1} parent=11 // pred_fallthru
          _
        // Predicated region
        $region25: #{tpu_custom_call.1} parent=11 // pred_check
          %p174 = pneg %p124
        $region26: #{tpu_custom_call.1} parent=11 // pred_check_branch
          %176 = sbr.rel (%p174) target = $region28
        $region27: #{tpu_custom_call.1} parent=11 // pred_region
          _
        $region28: #{tpu_custom_call.1} parent=11 // pred_fallthru
          _
      $region12: #{tpu_custom_call.1} parent=5 // pred_fallthru
        _
      %p177 = scmp.lt.s32.totalorder %s14, 2
      // Predicated region
      $region29: #{tpu_custom_call.1} parent=5 // pred_check
        %p178 = pneg %p177
      $region30: #{tpu_custom_call.1} parent=5 // pred_check_branch
        %180 = sbr.rel (%p178) target = $region32
      $region31: #{tpu_custom_call.1} parent=5 // pred_region
        // Predicated region
        $region33: #{tpu_custom_call.1} parent=31 // pred_check
          %p181 = pneg %p34
        $region34: #{tpu_custom_call.1} parent=31 // pred_check_branch
          %183 = sbr.rel (%p181) target = $region36
        $region35: #{tpu_custom_call.1} parent=31 // pred_region
          %p184 = scmp.lt.s32.totalorder %s14, 1
          %s185 = scalar_select %p184, %s14, 1
          %s186 = smul.addr %s185, 2
          %s187 = smul.addr %s186, 4
          %s188 = scalar_lea.vmem %s0, %s187
        $region36: #{tpu_custom_call.1} parent=31 // pred_fallthru
          _
      $region32: #{tpu_custom_call.1} parent=5 // pred_fallthru
        _
      %p189 = scmp.le.s32.totalorder 1, %s14
      %p190 = scmp.lt.s32.totalorder %s14, 3
      %p191 = pnand %p189, %p190
      %p192 = pneg %p191
      // Predicated region
      $region37: #{tpu_custom_call.1} parent=5 // pred_check
        _
      $region38: #{tpu_custom_call.1} parent=5 // pred_check_branch
        %194 = sbr.rel (%p191) target = $region40
      $region39: #{tpu_custom_call.1} parent=5 // pred_region
        %s195 = ssub.s32 %s14, 1
        %p196 = scmp.lt.s32.totalorder %s19, 1
        %s197 = scalar_select %p196, %s19, 1
        %s198 = smul.addr %s197, 2
        %s199 = smul.addr %s198, 4
        %s200 = scalar_lea.vmem %s0, %s199
        %p201 = pneg %p40
        %p202 = pneg %p37
        %p203 = pneg %p61
        %p204 = pneg %p58
        %p205 = pneg %p82
        %p206 = pneg %p79
        %p207 = pneg %p103
        %p208 = pneg %p100
        %p209 = pneg %p124
        %p210 = pneg %p121
        %p211 = pneg %p150
        %p212 = pneg %p147
        %s213 = sand.u32 %s137, 1
        %s214 = scalar_lea.sflag [#allocation3], %s213
        %s215 = sand.u32 %s137, 1
        %s216 = smul.addr %s215, 32
        %s217 = scalar_lea.vmem [#allocation2], %s216
        %p218 = scmp.lt.s32.totalorder %s19, 1
        %s219 = scalar_select %p218, %s19, 1
        %s220 = smul.addr %s219, 2
        %s221 = smul.addr %s220, 4
        %s222 = scalar_lea.vmem %s0, %s221
        %v224 = vld [vmem:[%s222] sm:$0xff]
        %v226 = vcombine.high %v224, %v224
        %v228 = vpack.c.bf16 %v224, %v224
        %v229 = vpack.c.bf16 %v226, %v226
        %v232 = vrot.slane %v228, 6
        %v233 = vrot.slane %v229, 6
        %234 = vrot.lane.b32.xlu0 %v232, 126
        %v235 = vpop.permute.xlu0 %234
        %236 = vrot.lane.b32.xlu0 %v233, 126
        %v237 = vpop.permute.xlu0 %236
        %vm238 = vcmask 1031168
        %v239 = vsel %vm238, %v235, %v237
        %v240 = vrot.slane %v228, 4
        %v241 = vrot.slane %v229, 4
        %242 = vrot.lane.b32.xlu0 %v240, 124
        %v243 = vpop.permute.xlu0 %242
        %244 = vrot.lane.b32.xlu0 %v241, 124
        %v245 = vpop.permute.xlu0 %244
        %vm246 = vcmask 1014784
        %v247 = vsel %vm246, %v243, %v245
        %vm248 = vcmask 1041408
        %v251 = vsel %vm248, %v228, %v239
        %vm252 = vcmask 1043456
        %v254 = vsel %vm252, %v251, %v247
        %v255 = vld [vmem:[%s1] sm:$0xf]
        %v256 = vld [vmem:[%s1 + $0x4] sm:$0xf]
        %v257 = vld [vmem:[%s1 + $0x8] sm:$0xf]
        %v258 = vld [vmem:[%s1 + $0xc] sm:$0xf]
        %v259 = vld [vmem:[%s1 + $0x10] sm:$0xf]
        %v260 = vld [vmem:[%s1 + $0x14] sm:$0xf]
        %v261 = vld [vmem:[%s1 + $0x18] sm:$0xf]
        %v262 = vld [vmem:[%s1 + $0x1c] sm:$0xf]
        %v263 = vld [vmem:[%s2] sm:$0xff]
        %v264 = vld [vmem:[%s2 + $0x8] sm:$0xff]
        %v265 = vld [vmem:[%s2 + $0x10] sm:$0xff]
        %v266 = vld [vmem:[%s2 + $0x18] sm:$0xff]
        %v267 = vld [vmem:[%s2 + $0x20] sm:$0xff]
        %v268 = vld [vmem:[%s2 + $0x28] sm:$0xff]
        %v269 = vld [vmem:[%s2 + $0x30] sm:$0xff]
        %v270 = vld [vmem:[%s2 + $0x38] sm:$0xff]
        %272 = vset.pattern.permute.xlu0 0
        %273 = vperm.xlu0 %272, %v263
        %v274 = vpop.permute.xlu0 %273
        %277 = vset.pattern.permute.xlu0 0
        %278 = vperm.xlu0 %277, %v264
        %v279 = vpop.permute.xlu0 %278
        %282 = vset.pattern.permute.xlu0 0
        %283 = vperm.xlu0 %282, %v265
        %v284 = vpop.permute.xlu0 %283
        %287 = vset.pattern.permute.xlu0 0
        %288 = vperm.xlu0 %287, %v266
        %v289 = vpop.permute.xlu0 %288
        %292 = vset.pattern.permute.xlu0 0
        %293 = vperm.xlu0 %292, %v267
        %v294 = vpop.permute.xlu0 %293
        %297 = vset.pattern.permute.xlu0 0
        %298 = vperm.xlu0 %297, %v268
        %v299 = vpop.permute.xlu0 %298
        %302 = vset.pattern.permute.xlu0 0
        %303 = vperm.xlu0 %302, %v269
        %v304 = vpop.permute.xlu0 %303
        %307 = vset.pattern.permute.xlu0 0
        %308 = vperm.xlu0 %307, %v270
        %v309 = vpop.permute.xlu0 %308
        %v319 = vunpack.c.l.b16 %v255
        %v320 = vunpack.c.l.b16 %v256
        %v321 = vunpack.c.l.b16 %v257
        %v322 = vunpack.c.l.b16 %v258
        %v323 = vunpack.c.l.b16 %v259
        %v324 = vunpack.c.l.b16 %v260
        %v325 = vunpack.c.l.b16 %v261
        %v326 = vunpack.c.l.b16 %v262
        %v327 = vpack.c.b16 %v320, %v319
        %v328 = vpack.c.b16 %v322, %v321
        %v329 = vpack.c.b16 %v324, %v323
        %v330 = vpack.c.b16 %v326, %v325
        %vm331 = vcmask 97280
        %v333 = vsel %vm331, %v327, 0
        %v336 = vsel %vm331, %v328, 0
        %v339 = vsel %vm331, %v329, 0
        %v342 = vsel %vm331, %v330, 0
        %vm344 = vcmask 1045504
        %v345 = vsel %vm344, %v254, 0
        %347 = vmatprep.subr.bf16.mxu0 0
        %348 = vmatpush1.bf16.msra.mxu0 0
        %349 = vmatprep.subr.bf16.mxu0 0
        %350 = vmatpush1.bf16.msra.mxu0 0
        %351 = vmatprep.subr.bf16.mxu0 0
        %352 = vmatpush1.bf16.msra.mxu0 0
        %353 = vmatprep.subr.bf16.mxu0 0
        %354 = vmatpush1.bf16.msra.mxu0 0
        %355 = vmatprep.subr.bf16.mxu0 0
        %356 = vmatpush1.bf16.msra.mxu0 0
        %357 = vmatprep.subr.bf16.mxu0 0
        %358 = vmatpush1.bf16.msra.mxu0 0
        %359 = vmatprep.subr.bf16.mxu0 0
        %360 = vmatpush1.bf16.msra.mxu0 0
        %361 = vmatprep.subr.bf16.mxu0 0
        %362 = vmatpush1.bf16.msra.mxu0 %v345
        %363 = vmatprep.subr.bf16.mxu0 0
        %364 = vmatpush2.bf16.msra.mxu0 0
        %365 = vmatprep.subr.bf16.mxu0 0
        %366 = vmatpush2.bf16.msra.mxu0 0
        %367 = vmatprep.subr.bf16.mxu0 0
        %368 = vmatpush2.bf16.msra.mxu0 0
        %369 = vmatprep.subr.bf16.mxu0 0
        %370 = vmatpush2.bf16.msra.mxu0 0
        %371 = vmatprep.subr.bf16.mxu0 0
        %372 = vmatpush2.bf16.msra.mxu0 0
        %373 = vmatprep.subr.bf16.mxu0 0
        %374 = vmatpush2.bf16.msra.mxu0 0
        %375 = vmatprep.subr.bf16.mxu0 0
        %376 = vmatpush2.bf16.msra.mxu0 0
        %377 = vmatprep.subr.bf16.mxu0 0
        %378 = vmatpush2.bf16.msra.mxu0 0
        %379 = vmatprep.mubr.bf16.mxu0 0
        %380 = vmatmul.mubr.bf16.gmra.mxu0 %v333
        %v381 = vpop.f32.mrf.mxu0
        %v382 = vadd.f32 %v274, %v381
        %v383 = vpop.f32.mrf.mxu0
        %v384 = vpop.f32.mrf.mxu0
        %v385 = vadd.f32 %v279, %v384
        %v386 = vpop.f32.mrf.mxu0
        %387 = vmatprep.mubr.bf16.mxu0 0
        %388 = vmatmul.mubr.bf16.gmra.mxu0 %v336
        %v389 = vpop.f32.mrf.mxu0
        %v390 = vadd.f32 %v284, %v389
        %v391 = vpop.f32.mrf.mxu0
        %v392 = vpop.f32.mrf.mxu0
        %v393 = vadd.f32 %v289, %v392
        %v394 = vpop.f32.mrf.mxu0
        %395 = vmatprep.mubr.bf16.mxu0 0
        %396 = vmatmul.mubr.bf16.gmra.mxu0 %v339
        %v397 = vpop.f32.mrf.mxu0
        %v398 = vadd.f32 %v294, %v397
        %v399 = vpop.f32.mrf.mxu0
        %v400 = vpop.f32.mrf.mxu0
        %v401 = vadd.f32 %v299, %v400
        %v402 = vpop.f32.mrf.mxu0
        %403 = vmatprep.mubr.bf16.mxu0 0
        %404 = vmatmul.mubr.bf16.gmra.mxu0 %v342
        %v405 = vpop.f32.mrf.mxu0
        %v406 = vadd.f32 %v304, %v405
        %v407 = vpop.f32.mrf.mxu0
        %v408 = vpop.f32.mrf.mxu0
        %v409 = vadd.f32 %v309, %v408
        %v410 = vpop.f32.mrf.mxu0
        %411 = vdwg.mxu0
        %vm412 = vcmp.ge.f32.partialorder %v382, 0.0
        %vm413 = vcmp.ge.f32.partialorder %v385, 0.0
        %vm414 = vcmp.ge.f32.partialorder %v390, 0.0
        %vm415 = vcmp.ge.f32.partialorder %v393, 0.0
        %v416 = vmul.f32 %v382, 0.01
        %v417 = vmul.f32 %v385, 0.01
        %v418 = vmul.f32 %v390, 0.01
        %v419 = vmul.f32 %v393, 0.01
        %v420 = vsel %vm412, %v382, %v416
        %v421 = vsel %vm413, %v385, %v417
        %v422 = vsel %vm414, %v390, %v418
        %v423 = vsel %vm415, %v393, %v419
        %v424 = vpack.c.bf16 %v421, %v420
        %v425 = vpack.c.bf16 %v423, %v422
        %428 = vrot.lane.b32.xlu0 %v424, 4
        %v429 = vpop.permute.xlu0 %428
        %430 = vrot.lane.b32.xlu0 %v425, 4
        %v431 = vpop.permute.xlu0 %430
        %vm432 = vcmask 31744
        %v435 = vsel %vm432, 0, %v429
        %v438 = vsel %vm432, 0, %v431
        %442 = vrot.lane.b32.xlu0 %v435, 126
        %v443 = vpop.permute.xlu0 %442
        %444 = vrot.lane.b32.xlu0 %v429, 126
        %v445 = vpop.permute.xlu0 %444
        %446 = vrot.lane.b32.xlu0 %v438, 126
        %v447 = vpop.permute.xlu0 %446
        %448 = vrot.lane.b32.xlu0 %v431, 126
        %v449 = vpop.permute.xlu0 %448
        %v450 = vsel %vm238, %v443, %v445
        %v451 = vsel %vm238, %v447, %v449
        %454 = vrot.lane.b32.xlu0 %v435, 124
        %v455 = vpop.permute.xlu0 %454
        %456 = vrot.lane.b32.xlu0 %v429, 124
        %v457 = vpop.permute.xlu0 %456
        %458 = vrot.lane.b32.xlu0 %v438, 124
        %v459 = vpop.permute.xlu0 %458
        %460 = vrot.lane.b32.xlu0 %v431, 124
        %v461 = vpop.permute.xlu0 %460
        %v462 = vsel %vm246, %v455, %v457
        %v463 = vsel %vm246, %v459, %v461
        %v466 = vld [vmem:[%s3] sm:$0xf]
        %v467 = vld [vmem:[%s3 + $0x4] sm:$0xf]
        %v468 = vld [vmem:[%s3 + $0x8] sm:$0xf]
        %v469 = vld [vmem:[%s3 + $0xc] sm:$0xf]
        %v470 = vld [vmem:[%s4] sm:$0xff]
        %v471 = vld [vmem:[%s4 + $0x8] sm:$0xff]
        %v472 = vld [vmem:[%s4 + $0x10] sm:$0xff]
        %v473 = vld [vmem:[%s4 + $0x18] sm:$0xff]
        %475 = vset.pattern.permute.xlu0 0
        %476 = vperm.xlu0 %475, %v470
        %v477 = vpop.permute.xlu0 %476
        %480 = vset.pattern.permute.xlu0 0
        %481 = vperm.xlu0 %480, %v471
        %v482 = vpop.permute.xlu0 %481
        %485 = vset.pattern.permute.xlu0 0
        %486 = vperm.xlu0 %485, %v472
        %v487 = vpop.permute.xlu0 %486
        %490 = vset.pattern.permute.xlu0 0
        %491 = vperm.xlu0 %490, %v473
        %v492 = vpop.permute.xlu0 %491
        %v498 = vunpack.c.l.b16 %v466
        %v499 = vunpack.c.l.b16 %v467
        %v500 = vunpack.c.l.b16 %v468
        %v501 = vunpack.c.l.b16 %v469
        %v502 = vpack.c.b16 %v499, %v498
        %v503 = vpack.c.b16 %v501, %v500
        %vm504 = vcmask 785408
        %v506 = vsel %vm504, %v502, 0
        %v509 = vsel %vm504, %v503, 0
        %511 = vmatprep.subr.bf16.mxu0 0
        %512 = vmatpush1.bf16.msra.mxu0 0
        %513 = vmatprep.subr.bf16.mxu0 0
        %514 = vmatpush1.bf16.msra.mxu0 0
        %515 = vmatprep.subr.bf16.mxu0 0
        %516 = vmatpush1.bf16.msra.mxu0 %v463
        %517 = vmatprep.subr.bf16.mxu0 0
        %518 = vmatpush1.bf16.msra.mxu0 %v462
        %519 = vmatprep.subr.bf16.mxu0 0
        %520 = vmatpush1.bf16.msra.mxu0 %v451
        %521 = vmatprep.subr.bf16.mxu0 0
        %522 = vmatpush1.bf16.msra.mxu0 %v450
        %523 = vmatprep.subr.bf16.mxu0 0
        %524 = vmatpush1.bf16.msra.mxu0 %v438
        %525 = vmatprep.subr.bf16.mxu0 0
        %526 = vmatpush1.bf16.msra.mxu0 %v435
        %527 = vmatprep.subr.bf16.mxu0 0
        %528 = vmatpush2.bf16.msra.mxu0 0
        %529 = vmatprep.subr.bf16.mxu0 0
        %530 = vmatpush2.bf16.msra.mxu0 0
        %531 = vmatprep.subr.bf16.mxu0 0
        %532 = vmatpush2.bf16.msra.mxu0 0
        %533 = vmatprep.subr.bf16.mxu0 0
        %534 = vmatpush2.bf16.msra.mxu0 0
        %535 = vmatprep.subr.bf16.mxu0 0
        %536 = vmatpush2.bf16.msra.mxu0 0
        %537 = vmatprep.subr.bf16.mxu0 0
        %538 = vmatpush2.bf16.msra.mxu0 0
        %539 = vmatprep.subr.bf16.mxu0 0
        %540 = vmatpush2.bf16.msra.mxu0 0
        %541 = vmatprep.subr.bf16.mxu0 0
        %542 = vmatpush2.bf16.msra.mxu0 0
        %543 = vmatprep.mubr.bf16.mxu0 0
        %544 = vmatmul.mubr.bf16.gmra.mxu0 %v506
        %v545 = vpop.f32.mrf.mxu0
        %v546 = vadd.f32 %v477, %v545
        %v547 = vpop.f32.mrf.mxu0
        %v548 = vpop.f32.mrf.mxu0
        %v549 = vadd.f32 %v482, %v548
        %v550 = vpop.f32.mrf.mxu0
        %551 = vmatprep.mubr.bf16.mxu0 0
        %552 = vmatmul.mubr.bf16.gmra.mxu0 %v509
        %v553 = vpop.f32.mrf.mxu0
        %v554 = vadd.f32 %v487, %v553
        %v555 = vpop.f32.mrf.mxu0
        %v556 = vpop.f32.mrf.mxu0
        %v557 = vadd.f32 %v492, %v556
        %v558 = vpop.f32.mrf.mxu0
        %559 = vdwg.mxu0
        %vm560 = vcmp.ge.f32.partialorder %v546, 0.0
        %vm561 = vcmp.ge.f32.partialorder %v549, 0.0
        %vm562 = vcmp.ge.f32.partialorder %v554, 0.0
        %vm563 = vcmp.ge.f32.partialorder %v557, 0.0
        %v564 = vmul.f32 %v546, 0.01
        %v565 = vmul.f32 %v549, 0.01
        %v566 = vmul.f32 %v554, 0.01
        %v567 = vmul.f32 %v557, 0.01
        %v568 = vsel %vm560, %v546, %v564
        %v569 = vsel %vm561, %v549, %v565
        %v570 = vsel %vm562, %v554, %v566
        %v571 = vsel %vm563, %v557, %v567
        %v572 = vadd.f32 %v568, %v398
        %v573 = vadd.f32 %v569, %v401
        %v574 = vadd.f32 %v570, %v406
        %v575 = vadd.f32 %v571, %v409
        %576 = vst [vmem:[%s217] sm:$0xff] %v572
        %577 = vst [vmem:[%s217 + $0x8] sm:$0xff] %v573
        %578 = vst [vmem:[%s217 + $0x10] sm:$0xff] %v574
        %579 = vst [vmem:[%s217 + $0x18] sm:$0xff] %v575
        %s580 = sand.u32 %s137, 1
        %s581 = scalar_lea.sflag [#allocation3], %s580
        %s582 = sand.u32 %s137, 1
        %s583 = smul.addr %s582, 32
        %s584 = scalar_lea.vmem [#allocation2], %s583
        // Predicated region
        $region41: #{tpu_custom_call.1} parent=39 // pred_check
          %p585 = pneg %p147
        $region42: #{tpu_custom_call.1} parent=39 // pred_check_branch
          %587 = sbr.rel (%p585) target = $region44
        $region43: #{tpu_custom_call.1} parent=39 // pred_region
          %s589 = ssub.s32 512, 512
          %590 = vsyncadd %s581, %s589
          %s591 = smul.addr %s19, 4
          %s592 = smul.addr %s591, 128
          %s593 = scalar_lea.hbm %s5, %s592
          %s594 = sshll.u32 %s584, 4
          %s595 = int_to_ptr.vmem [resolvable:$true] %s594
          %600 = dma.vmem_to_hbm [thread:$0]  %s595, 512, %s593, %s581, 128, 128, 8
        $region44: #{tpu_custom_call.1} parent=39 // pred_fallthru
          _
      $region40: #{tpu_custom_call.1} parent=5 // pred_fallthru
        _
      %p601 = scmp.le.s32.totalorder 2, %s14
      // Predicated region
      $region45: #{tpu_custom_call.1} parent=5 // pred_check
        %p602 = pneg %p601
      $region46: #{tpu_custom_call.1} parent=5 // pred_check_branch
        %604 = sbr.rel (%p602) target = $region48
      $region47: #{tpu_custom_call.1} parent=5 // pred_region
        %s605 = ssub.s32 %s14, 2
        // Predicated region
        $region49: #{tpu_custom_call.1} parent=47 // pred_check
          %p606 = pneg %p153
        $region50: #{tpu_custom_call.1} parent=47 // pred_check_branch
          %608 = sbr.rel (%p606) target = $region52
        $region51: #{tpu_custom_call.1} parent=47 // pred_region
          %s609 = sand.u32 %s138, 1
          %s610 = scalar_lea.sflag [#allocation3], %s609
          %s611 = sand.u32 %s138, 1
          %s612 = smul.addr %s611, 32
          %s613 = scalar_lea.vmem [#allocation2], %s612
          %614 = dma.done %s610, 512
        $region52: #{tpu_custom_call.1} parent=47 // pred_fallthru
          _
      $region48: #{tpu_custom_call.1} parent=5 // pred_fallthru
        _
    $region6: #{tpu_custom_call.1} parent=1 // loop_footer
      %s18 = sadd.s32 1, %s14
    $region7: #{tpu_custom_call.1} parent=1 // loop_footer_branch
      %13 = sbr.rel target = $region3
    $region8: #{tpu_custom_call.1} parent=1 // loop_exit
      _
    %615 = vsyncpa [#allocation3], 1
    %s616 = scalar_lea.sflag [#allocation3], 1
    %617 = vsyncpa %s616, 1

</llo_original>
